<compile_context>
chip_gen: v5e
topology: v5e:2x2
jax: 0.10.0
libtpu: 0.0.40
codegen_flags: <defaults>
</compile_context>

<pallas_src>
import functools
import math

import jax
import jax.numpy as jnp
from jax import lax
from jax.experimental import pallas as pl
from jax.experimental.pallas import tpu as pltpu


def _round_up(n, m):
    return (n + m - 1) // m * m


# ----------------------------- Pallas kernel ------------------------------ #
def nabla_mu_kernel(x_ref, t_ref, vec_ref, w_ref, out_ref, *,
                    half, bn, t2, hid, outp, latent, offs):
    # Static row offsets of each weight block inside the packed weight slab.
    o_wbn, o_ws, o_wc, o_wh, o_wt, o_w1, o_wo = offs

    x = x_ref[...]                                  # (TB, latent)
    t = t_ref[...]                                  # (TB, 1)

    # Packed (1, N) vectors: static slices of one (8, W) VMEM slab.
    freq = vec_ref[0:1, :half]
    bbn  = vec_ref[1:2, :bn]
    ln_g = vec_ref[2:3, :bn]
    ln_b = vec_ref[3:4, :bn]
    bt1  = vec_ref[4:5, :t2]
    bm0  = vec_ref[5:6, :hid]                       # bm0 + bt2 @ wm0_time
    bm1  = vec_ref[6:7, :hid]
    bout = vec_ref[7:8, :outp]                      # bmo @ wo_bd + bo_bd (padded)

    # ---- bottleneck: Linear -> LayerNorm -> Tanh ----
    h = jnp.dot(x, w_ref[o_wbn:o_wbn + latent, :bn],
                preferred_element_type=jnp.float32) + bbn
    mu  = jnp.mean(h, axis=-1, keepdims=True)
    var = jnp.mean(jnp.square(h - mu), axis=-1, keepdims=True)
    h = jnp.tanh((h - mu) * lax.rsqrt(var + 1e-5) * ln_g + ln_b)   # (TB, bn)

    # ---- sinusoidal time embedding + first embed Linear + ReLU ----
    # (second embed Linear wt2 is constant-folded into the trunk below)
    ph = t * freq                                                   # (TB, half)
    te1 = jnp.maximum(
        jnp.dot(jnp.sin(ph), w_ref[o_ws:o_ws + half, :t2],
                preferred_element_type=jnp.float32)
        + jnp.dot(jnp.cos(ph), w_ref[o_wc:o_wc + half, :t2],
                  preferred_element_type=jnp.float32)
        + bt1, 0.0)                                                 # (TB, t2)

    # ---- trunk MLP; first layer split over (h, te1), wt2 folded in ----
    z = jnp.maximum(
        jnp.dot(h, w_ref[o_wh:o_wh + bn, :hid],
                preferred_element_type=jnp.float32)
        + jnp.dot(te1, w_ref[o_wt:o_wt + t2, :hid],
                  preferred_element_type=jnp.float32)
        + bm0, 0.0)
    z = jnp.maximum(
        jnp.dot(z, w_ref[o_w1:o_w1 + hid, :hid],
                preferred_element_type=jnp.float32) + bm1, 0.0)

    # ---- fused (wmo @ kron(I_F, wo)) output, lane-dense padded to `outp` ----
    out_ref[...] = (jnp.dot(z, w_ref[o_wo:o_wo + hid, :outp],
                            preferred_element_type=jnp.float32)
                    + bout).astype(out_ref.dtype)                   # (TB, outp)


# --------------------- one-time parameter packing --------------------------- #
def pack_params(params, *, feature_dim, latent_dim):
    """Fuse + pack parameters once; keep this OUT of the per-step hot path."""
    f32 = jnp.float32
    g = lambda k: params[k].astype(f32)

    wbn, bbn = g("wbn"), g("bbn")
    wt1, bt1 = g("wt1"), g("bt1")
    wt2, bt2 = g("wt2"), g("bt2")
    wm0, bm0 = g("wm0"), g("bm0")
    wm1, bm1 = g("wm1"), g("bm1")
    wmo, bmo = g("wmo"), g("bmo")
    wo,  bo  = g("wo"),  g("bo")
    freq, ln_g, ln_b = g("freq"), g("ln_g"), g("ln_b")

    latent, bn = wbn.shape
    t2 = wt1.shape[1]                 # time_dim * 2
    half = wt1.shape[0] // 2          # time_dim // 2
    time_dim = wt2.shape[1]
    hid = wm1.shape[0]
    flat = feature_dim * latent_dim
    outp = _round_up(flat, 128)       # lane-dense output width

    # Fold #1: wt2 into the time slice of the trunk's first Linear.
    wm0_h = wm0[:bn, :]
    wm0_t_raw = wm0[bn:bn + time_dim, :]
    wm0_t = wt2 @ wm0_t_raw                                   # (t2, hid)
    bm0_f = bm0 + bt2 @ wm0_t_raw                             # (1, hid)

    # Fold #2: trunk output Linear + per-feature output Linear (block-diag).
    wo_bd = jnp.kron(jnp.eye(feature_dim, dtype=f32), wo)     # (F*bn, F*latent)
    bo_bd = jnp.tile(bo, (1, feature_dim))                    # (1, F*latent)
    wout = jnp.pad(wmo @ wo_bd, ((0, 0), (0, outp - flat)))   # (hid, outp)
    bout = jnp.pad(bmo @ wo_bd + bo_bd, ((0, 0), (0, outp - flat)))

    W = _round_up(max(half, bn, t2, hid, outp), 128)

    # (8, W) vector slab — one DMA for every (1, N) vector.
    vec_rows = [freq, bbn, ln_g, ln_b, bt1, bm0_f, bm1, bout]
    vecs = jnp.concatenate(
        [jnp.pad(v.reshape(1, -1), ((0, 0), (0, W - v.shape[-1])))
         for v in vec_rows], axis=0)

    # Single weight slab: each block padded to W lanes and 8-row boundaries.
    blocks = [wbn, wt1[:half], wt1[half:2 * half], wm0_h, wm0_t, wm1, wout]
    offs, padded, r = [], [], 0
    for blk in blocks:
        offs.append(r)
        pr = _round_up(blk.shape[0], 8)
        padded.append(jnp.pad(blk, ((0, pr - blk.shape[0]),
                                    (0, W - blk.shape[1]))))
        r += pr
    wslab = jnp.concatenate(padded, axis=0)                   # (R, W)

    dims = dict(half=half, bn=bn, t2=t2, hid=hid, outp=outp, latent=latent,
                offs=tuple(offs))
    return dict(vecs=vecs, wslab=wslab, dims=dims, flat=flat,
                feature_dim=feature_dim, latent_dim=latent_dim)


# ------------------------------- forward ----------------------------------- #
def nabla_mu_forward(packed, x, t):
    B, latent_in = x.shape
    dims = packed["dims"]
    outp = dims["outp"]
    f32 = jnp.float32

    # Batch tiling: single tile at tiny B; >= 2 "parallel" tiles once B >= 16
    # (v7x megacore); cap at 256 rows for large batches.
    if B <= 8:
        TB = B
    else:
        TB = min(256, _round_up(pl.cdiv(B, 2), 8))
    grid = (pl.cdiv(B, TB),)

    kernel = functools.partial(nabla_mu_kernel, **dims)

    y2d = pl.pallas_call(
        kernel,
        grid=grid,
        in_specs=[
            pl.BlockSpec((TB, latent_in), lambda i: (i, 0)),
            pl.BlockSpec((TB, 1), lambda i: (i, 0)),
            pl.BlockSpec(packed["vecs"].shape, lambda i: (0, 0)),
            pl.BlockSpec(packed["wslab"].shape, lambda i: (0, 0)),
        ],
        out_specs=pl.BlockSpec((TB, outp), lambda i: (i, 0)),
        out_shape=jax.ShapeDtypeStruct((B, outp), f32),
        compiler_params=pltpu.CompilerParams(
            dimension_semantics=("parallel",)),
    )(x.astype(f32), t.astype(f32), packed["vecs"], packed["wslab"])

    # Strip lane padding and view as (B, F, latent) — cheap wrapper ops.
    return y2d[:, :packed["flat"]].reshape(B, packed["feature_dim"],
                                           packed["latent_dim"])


# ------------------------- parameter construction -------------------------- #
def make_params(key, latent_dim, time_dim, bn_dim, feature_dim, hidden_dim):
    ks = jax.random.split(key, 8)

    def lin(k, fan_in, fan_out):
        s = 1.0 / math.sqrt(fan_in)
        kw, kb = jax.random.split(k)
        w = jax.random.uniform(kw, (fan_in, fan_out), jnp.float32, -s, s)
        b = jax.random.uniform(kb, (1, fan_out), jnp.float32, -s, s)
        return w, b

    half = time_dim // 2
    scale = math.log(10000.0) / max(half - 1, 1)
    freq = jnp.exp(jnp.arange(half, dtype=jnp.float32) * -scale)[None, :]

    wbn, bbn = lin(ks[0], latent_dim, bn_dim)
    wt1, bt1 = lin(ks[1], time_dim, time_dim * 2)
    wt2, bt2 = lin(ks[2], time_dim * 2, time_dim)
    wm0, bm0 = lin(ks[3], time_dim + bn_dim, hidden_dim)
    wm1, bm1 = lin(ks[4], hidden_dim, hidden_dim)
    wmo, bmo = lin(ks[5], hidden_dim, bn_dim * feature_dim)
    wo, bo = lin(ks[6], bn_dim, latent_dim)

    return dict(
        freq=freq,
        wbn=wbn, bbn=bbn,
        ln_g=jnp.ones((1, bn_dim), jnp.float32),
        ln_b=jnp.zeros((1, bn_dim), jnp.float32),
        wt1=wt1, bt1=bt1, wt2=wt2, bt2=bt2,
        wm0=wm0, bm0=bm0, wm1=wm1, bm1=bm1, wmo=wmo, bmo=bmo,
        wo=wo, bo=bo,
    )


# ---------------------------- pure-JAX reference --------------------------- #
def reference_forward(p, x, t, *, feature_dim, latent_dim):
    h = x @ p["wbn"] + p["bbn"]
    mu = h.mean(-1, keepdims=True)
    var = ((h - mu) ** 2).mean(-1, keepdims=True)
    h = jnp.tanh((h - mu) / jnp.sqrt(var + 1e-5) * p["ln_g"] + p["ln_b"])
    emb = t * p["freq"]
    emb = jnp.concatenate([jnp.sin(emb), jnp.cos(emb)], axis=-1)
    te = jnp.maximum(emb @ p["wt1"] + p["bt1"], 0.0) @ p["wt2"] + p["bt2"]
    z = jnp.concatenate([h, te], axis=-1)
    z = jnp.maximum(z @ p["wm0"] + p["bm0"], 0.0)
    z = jnp.maximum(z @ p["wm1"] + p["bm1"], 0.0)
    z = z @ p["wmo"] + p["bmo"]
    z = z.reshape(z.shape[0], feature_dim, -1)
    return z @ p["wo"] + p["bo"]


# ----------------------------------- main ----------------------------------- #
if __name__ == "__main__":
    B = 8
    latent_dim = 16
    time_dim = 32
    bn_dim = 16
    feature_dim = 4
    hidden_dim = 64
    # hidden_depth = 2 (two hidden layers in the trunk MLP)

    key = jax.random.PRNGKey(0)
    kx, kt, kp = jax.random.split(key, 3)
    x = jax.random.normal(kx, (B, latent_dim), jnp.float32)
    timestep = jax.random.uniform(kt, (B, 1), jnp.float32, 0.0, 1000.0)

    params = make_params(kp, latent_dim, time_dim, bn_dim, feature_dim,
                         hidden_dim)
    packed = pack_params(params, feature_dim=feature_dim,
                         latent_dim=latent_dim)   # one-time, outside hot path

    out = nabla_mu_forward(packed, x, timestep)
    out = jax.block_until_ready(out)

    ref = reference_forward(params, x, timestep,
                            feature_dim=feature_dim, latent_dim=latent_dim)
    assert out.shape == (B, feature_dim, latent_dim)
    err = float(jnp.max(jnp.abs(out - ref)))
    assert jnp.allclose(out, ref, atol=1e-3, rtol=1e-3), f"max abs err {err}"

    print("KERNEL_OK")
</pallas_src>

<mosaic_0001>
module attributes {stable_mosaic.version = 11 : i64} {
  func.func @nabla_mu_kernel(%arg0: i32, %arg1: memref<8x16xf32, #tpu.memory_space<vmem>>, %arg2: memref<8x1xf32, #tpu.memory_space<vmem>>, %arg3: memref<8x128xf32, #tpu.memory_space<vmem>>, %arg4: memref<256x128xf32, #tpu.memory_space<vmem>>, %arg5: memref<8x128xf32, #tpu.memory_space<vmem>>) attributes {dimension_semantics = [#tpu.dimension_semantics<parallel>], iteration_bounds = array<i64: 1>, scalar_prefetch = 0 : i64, scratch_operands = 0 : i64, tpu.core_type = #tpu.core_type<tc>, window_params = [{transform_indices = @transform_0, window_bounds = array<i64: 8, 16>}, {transform_indices = @transform_1, window_bounds = array<i64: 8, 1>}, {pipeline_mode = #tpu.pipeline_mode<synchronous>, transform_indices = @transform_2, window_bounds = array<i64: 8, 128>}, {pipeline_mode = #tpu.pipeline_mode<synchronous>, transform_indices = @transform_3, window_bounds = array<i64: 256, 128>}, {transform_indices = @transform_4, window_bounds = array<i64: 8, 128>}]} {
    %c0 = arith.constant 0 : index
    %c0_0 = arith.constant 0 : index
    %0 = vector.load %arg1[%c0, %c0_0] : memref<8x16xf32, #tpu.memory_space<vmem>>, vector<8x16xf32>
    %c0_1 = arith.constant 0 : index
    %c0_2 = arith.constant 0 : index
    %1 = vector.load %arg2[%c0_1, %c0_2] : memref<8x1xf32, #tpu.memory_space<vmem>>, vector<8x1xf32>
    %c0_3 = arith.constant 0 : index
    %c0_4 = arith.constant 0 : index
    %2 = vector.load %arg3[%c0_3, %c0_4] : memref<8x128xf32, #tpu.memory_space<vmem>>, vector<1x16xf32>
    %c1 = arith.constant 1 : index
    %c0_5 = arith.constant 0 : index
    %3 = vector.load %arg3[%c1, %c0_5] : memref<8x128xf32, #tpu.memory_space<vmem>>, vector<1x16xf32>
    %c2 = arith.constant 2 : index
    %c0_6 = arith.constant 0 : index
    %4 = vector.load %arg3[%c2, %c0_6] : memref<8x128xf32, #tpu.memory_space<vmem>>, vector<1x16xf32>
    %c3 = arith.constant 3 : index
    %c0_7 = arith.constant 0 : index
    %5 = vector.load %arg3[%c3, %c0_7] : memref<8x128xf32, #tpu.memory_space<vmem>>, vector<1x16xf32>
    %c4 = arith.constant 4 : index
    %c0_8 = arith.constant 0 : index
    %6 = vector.load %arg3[%c4, %c0_8] : memref<8x128xf32, #tpu.memory_space<vmem>>, vector<1x64xf32>
    %c5 = arith.constant 5 : index
    %c0_9 = arith.constant 0 : index
    %7 = vector.load %arg3[%c5, %c0_9] : memref<8x128xf32, #tpu.memory_space<vmem>>, vector<1x64xf32>
    %c6 = arith.constant 6 : index
    %c0_10 = arith.constant 0 : index
    %8 = vector.load %arg3[%c6, %c0_10] : memref<8x128xf32, #tpu.memory_space<vmem>>, vector<1x64xf32>
    %c7 = arith.constant 7 : index
    %c0_11 = arith.constant 0 : index
    %9 = vector.load %arg3[%c7, %c0_11] : memref<8x128xf32, #tpu.memory_space<vmem>>, vector<1x128xf32>
    %c0_12 = arith.constant 0 : index
    %c0_13 = arith.constant 0 : index
    %10 = vector.load %arg4[%c0_12, %c0_13] : memref<256x128xf32, #tpu.memory_space<vmem>>, vector<16x16xf32>
    %cst = arith.constant dense<0.000000e+00> : vector<8x16xf32>
    %11 = tpu.matmul %0, %10, %cst {dimension_numbers = #tpu.dot_dimension_numbers<[1], [0], [0], [1], [0, 0, 1, 1], [], []>} : vector<8x16xf32>, vector<16x16xf32>, vector<8x16xf32> -> vector<8x16xf32>
    %12 = vector.broadcast %3 : vector<1x16xf32> to vector<8x16xf32>
    %13 = arith.addf %11, %12 : vector<8x16xf32>
    %cst_14 = arith.constant dense<0.000000e+00> : vector<8xf32>
    %14 = vector.multi_reduction <add>, %13, %cst_14 [1] : vector<8x16xf32> to vector<8xf32>
    %15 = vector.shape_cast %14 : vector<8xf32> to vector<8x1xf32>
    %cst_15 = arith.constant 1.600000e+01 : f32
    %16 = vector.broadcast %cst_15 : f32 to vector<8x1xf32>
    %17 = arith.divf %15, %16 : vector<8x1xf32>
    %18 = vector.broadcast %17 : vector<8x1xf32> to vector<8x16xf32>
    %19 = arith.subf %13, %18 : vector<8x16xf32>
    %20 = arith.mulf %19, %19 : vector<8x16xf32>
    %cst_16 = arith.constant dense<0.000000e+00> : vector<8xf32>
    %21 = vector.multi_reduction <add>, %20, %cst_16 [1] : vector<8x16xf32> to vector<8xf32>
    %22 = vector.shape_cast %21 : vector<8xf32> to vector<8x1xf32>
    %cst_17 = arith.constant 1.600000e+01 : f32
    %23 = vector.broadcast %cst_17 : f32 to vector<8x1xf32>
    %24 = arith.divf %22, %23 : vector<8x1xf32>
    %25 = vector.broadcast %17 : vector<8x1xf32> to vector<8x16xf32>
    %26 = arith.subf %13, %25 : vector<8x16xf32>
    %cst_18 = arith.constant 9.99999974E-6 : f32
    %27 = vector.broadcast %cst_18 : f32 to vector<8x1xf32>
    %28 = arith.addf %24, %27 : vector<8x1xf32>
    %29 = math.rsqrt %28 : vector<8x1xf32>
    %30 = vector.broadcast %29 : vector<8x1xf32> to vector<8x16xf32>
    %31 = arith.mulf %26, %30 : vector<8x16xf32>
    %32 = vector.broadcast %4 : vector<1x16xf32> to vector<8x16xf32>
    %33 = arith.mulf %31, %32 : vector<8x16xf32>
    %34 = vector.broadcast %5 : vector<1x16xf32> to vector<8x16xf32>
    %35 = arith.addf %33, %34 : vector<8x16xf32>
    %36 = math.tanh %35 : vector<8x16xf32>
    %37 = vector.broadcast %1 : vector<8x1xf32> to vector<8x16xf32>
    %38 = vector.broadcast %2 : vector<1x16xf32> to vector<8x16xf32>
    %39 = arith.mulf %37, %38 : vector<8x16xf32>
    %40 = math.sin %39 : vector<8x16xf32>
    %c16 = arith.constant 16 : index
    %c0_19 = arith.constant 0 : index
    %41 = vector.load %arg4[%c16, %c0_19] : memref<256x128xf32, #tpu.memory_space<vmem>>, vector<16x64xf32>
    %cst_20 = arith.constant dense<0.000000e+00> : vector<8x64xf32>
    %42 = tpu.matmul %40, %41, %cst_20 {dimension_numbers = #tpu.dot_dimension_numbers<[1], [0], [0], [1], [0, 0, 1, 1], [], []>} : vector<8x16xf32>, vector<16x64xf32>, vector<8x64xf32> -> vector<8x64xf32>
    %43 = math.cos %39 : vector<8x16xf32>
    %c32 = arith.constant 32 : index
    %c0_21 = arith.constant 0 : index
    %44 = vector.load %arg4[%c32, %c0_21] : memref<256x128xf32, #tpu.memory_space<vmem>>, vector<16x64xf32>
    %cst_22 = arith.constant dense<0.000000e+00> : vector<8x64xf32>
    %45 = tpu.matmul %43, %44, %cst_22 {dimension_numbers = #tpu.dot_dimension_numbers<[1], [0], [0], [1], [0, 0, 1, 1], [], []>} : vector<8x16xf32>, vector<16x64xf32>, vector<8x64xf32> -> vector<8x64xf32>
    %46 = arith.addf %42, %45 : vector<8x64xf32>
    %47 = vector.broadcast %6 : vector<1x64xf32> to vector<8x64xf32>
    %48 = arith.addf %46, %47 : vector<8x64xf32>
    %cst_23 = arith.constant 0.000000e+00 : f32
    %49 = vector.broadcast %cst_23 : f32 to vector<8x64xf32>
    %50 = arith.maximumf %48, %49 : vector<8x64xf32>
    %c48 = arith.constant 48 : index
    %c0_24 = arith.constant 0 : index
    %51 = vector.load %arg4[%c48, %c0_24] : memref<256x128xf32, #tpu.memory_space<vmem>>, vector<16x64xf32>
    %cst_25 = arith.constant dense<0.000000e+00> : vector<8x64xf32>
    %52 = tpu.matmul %36, %51, %cst_25 {dimension_numbers = #tpu.dot_dimension_numbers<[1], [0], [0], [1], [0, 0, 1, 1], [], []>} : vector<8x16xf32>, vector<16x64xf32>, vector<8x64xf32> -> vector<8x64xf32>
    %c64 = arith.constant 64 : index
    %c0_26 = arith.constant 0 : index
    %53 = vector.load %arg4[%c64, %c0_26] : memref<256x128xf32, #tpu.memory_space<vmem>>, vector<64x64xf32>
    %cst_27 = arith.constant dense<0.000000e+00> : vector<8x64xf32>
    %54 = tpu.matmul %50, %53, %cst_27 {dimension_numbers = #tpu.dot_dimension_numbers<[1], [0], [0], [1], [0, 0, 1, 1], [], []>} : vector<8x64xf32>, vector<64x64xf32>, vector<8x64xf32> -> vector<8x64xf32>
    %55 = arith.addf %52, %54 : vector<8x64xf32>
    %56 = vector.broadcast %7 : vector<1x64xf32> to vector<8x64xf32>
    %57 = arith.addf %55, %56 : vector<8x64xf32>
    %cst_28 = arith.constant 0.000000e+00 : f32
    %58 = vector.broadcast %cst_28 : f32 to vector<8x64xf32>
    %59 = arith.maximumf %57, %58 : vector<8x64xf32>
    %c128 = arith.constant 128 : index
    %c0_29 = arith.constant 0 : index
    %60 = vector.load %arg4[%c128, %c0_29] : memref<256x128xf32, #tpu.memory_space<vmem>>, vector<64x64xf32>
    %cst_30 = arith.constant dense<0.000000e+00> : vector<8x64xf32>
    %61 = tpu.matmul %59, %60, %cst_30 {dimension_numbers = #tpu.dot_dimension_numbers<[1], [0], [0], [1], [0, 0, 1, 1], [], []>} : vector<8x64xf32>, vector<64x64xf32>, vector<8x64xf32> -> vector<8x64xf32>
    %62 = vector.broadcast %8 : vector<1x64xf32> to vector<8x64xf32>
    %63 = arith.addf %61, %62 : vector<8x64xf32>
    %cst_31 = arith.constant 0.000000e+00 : f32
    %64 = vector.broadcast %cst_31 : f32 to vector<8x64xf32>
    %65 = arith.maximumf %63, %64 : vector<8x64xf32>
    %c192 = arith.constant 192 : index
    %c0_32 = arith.constant 0 : index
    %66 = vector.load %arg4[%c192, %c0_32] : memref<256x128xf32, #tpu.memory_space<vmem>>, vector<64x128xf32>
    %cst_33 = arith.constant dense<0.000000e+00> : vector<8x128xf32>
    %67 = tpu.matmul %65, %66, %cst_33 {dimension_numbers = #tpu.dot_dimension_numbers<[1], [0], [0], [1], [0, 0, 1, 1], [], []>} : vector<8x64xf32>, vector<64x128xf32>, vector<8x128xf32> -> vector<8x128xf32>
    %68 = vector.broadcast %9 : vector<1x128xf32> to vector<8x128xf32>
    %69 = arith.addf %67, %68 : vector<8x128xf32>
    %c0_34 = arith.constant 0 : index
    %c0_35 = arith.constant 0 : index
    %70 = vector.load %arg5[%c0_34, %c0_35] : memref<8x128xf32, #tpu.memory_space<vmem>>, vector<8x128xf32>
    tpu.vector_store %arg5[%c0_34, %c0_35], %69 {strides = array<i32>} : memref<8x128xf32, #tpu.memory_space<vmem>>, vector<8x128xf32>,
    return
  }
  func.func @transform_0(%arg0: i32) -> (i32, i32) {
    %c0_i32 = arith.constant 0 : i32
    %c0_i32_0 = arith.constant 0 : i32
    return %arg0, %c0_i32 : i32, i32
  }
  func.func @transform_1(%arg0: i32) -> (i32, i32) {
    %c0_i32 = arith.constant 0 : i32
    %c0_i32_0 = arith.constant 0 : i32
    return %arg0, %c0_i32 : i32, i32
  }
  func.func @transform_2(%arg0: i32) -> (i32, i32) {
    %c0_i32 = arith.constant 0 : i32
    %c0_i32_0 = arith.constant 0 : i32
    %c0_i32_1 = arith.constant 0 : i32
    return %c0_i32, %c0_i32_0 : i32, i32
  }
  func.func @transform_3(%arg0: i32) -> (i32, i32) {
    %c0_i32 = arith.constant 0 : i32
    %c0_i32_0 = arith.constant 0 : i32
    %c0_i32_1 = arith.constant 0 : i32
    return %c0_i32, %c0_i32_0 : i32, i32
  }
  func.func @transform_4(%arg0: i32) -> (i32, i32) {
    %c0_i32 = arith.constant 0 : i32
    %c0_i32_0 = arith.constant 0 : i32
    return %arg0, %c0_i32 : i32, i32
  }
}

</mosaic_0001>

<llo_original>
// kernel: tpu_custom_call.1
$region0: #{tpu_custom_call.1}
  #allocation0 [shape = 'u32[]', space=smem, size = 0x4, offset = 0x4, fixed_abs, tag = 'smem constant byte address 0x4 - core index']
  #allocation1 [shape = 'u32[72,128]{1,0:T(1,128)}', space=vmem, size = 0x9000, scoped, tag = 'internal scratch']
  %s0 = inlined_call_operand.vmem [shape: f32[8,16], index: 0, kind: input, shape index: {}]
  %s1 = inlined_call_operand.vmem [shape: f32[8,1], index: 1, kind: input, shape index: {}]
  %s2 = inlined_call_operand.hbm [shape: f32[8,128], index: 2, kind: input, shape index: {}]
  %s3 = inlined_call_operand.hbm [shape: f32[256,128], index: 3, kind: input, shape index: {}]
  %s4 = inlined_call_operand.hbm [shape: f32[8,128], index: 4, kind: output, shape index: {}]
  %s5 = sld [smem:[#allocation0]]
  $region34: #{tpu_custom_call.1} parent=0
    _
  %s7 = ssub.s32 1, %s5
  %s8 = scalar_select 0, %s7, %s5
  $region1: #{tpu_custom_call.1} parent=0
    #allocation2 [shape = 'u8[4096]{0}', space=vmem, size = 0x1000, scoped, tag = 'input window, operand 2, single buffered']
    #allocation3 [shape = 's32[1]{0}', space=sflag, size = 0x4, scoped, tag = 'scoped memory for tpu_custom_call.1']
    #allocation4 [shape = 's32[1]{0}', space=sflag, size = 0x4, scoped, tag = 'scoped memory for tpu_custom_call.1']
    #allocation5 [shape = 'u8[131072]{0}', space=vmem, size = 0x20000, scoped, tag = 'input window, operand 3, single buffered']
    #allocation6 [shape = 's32[1]{0}', space=sflag, size = 0x4, scoped, tag = 'scoped memory for tpu_custom_call.1']
    #allocation7 [shape = 'u8[4096]{0}', space=vmem, size = 0x1000, scoped, tag = 'output window, operand 0, single buffered']
    %9 = vsyncpa [#allocation3], 0
    %10 = vsyncpa [#allocation6], 0
    %11 = vsyncpa [#allocation4], 0
    // Predicated region
    $region2: #{tpu_custom_call.1} parent=1 // pred_check
      _
    $region3: #{tpu_custom_call.1} parent=1 // pred_check_branch
      %13 = sbr.rel (0) target = $region5
    $region4: #{tpu_custom_call.1} parent=1 // pred_region
      _
    $region5: #{tpu_custom_call.1} parent=1 // pred_fallthru
      _
    // Predicated region
    $region6: #{tpu_custom_call.1} parent=1 // pred_check
      _
    $region7: #{tpu_custom_call.1} parent=1 // pred_check_branch
      %15 = sbr.rel (0) target = $region9
    $region8: #{tpu_custom_call.1} parent=1 // pred_region
      _
    $region9: #{tpu_custom_call.1} parent=1 // pred_fallthru
      _
    // Predicated region
    $region10: #{tpu_custom_call.1} parent=1 // pred_check
      _
    $region11: #{tpu_custom_call.1} parent=1 // pred_check_branch
      %17 = sbr.rel (0) target = $region13
    $region12: #{tpu_custom_call.1} parent=1 // pred_region
      %19 = vsyncadd [#allocation3], 0
      %s21 = sshll.u32 %s2, 4
      %s22 = int_to_ptr.hbm [resolvable:$true] %s21
      %s23 = sshll.u32 [#allocation2], 4
      %s24 = int_to_ptr.vmem [resolvable:$true] %s23
      %26 = dma.hbm_to_vmem [thread:$0]  %s22, 128, %s24, [#allocation3]
    $region13: #{tpu_custom_call.1} parent=1 // pred_fallthru
      _
    // Predicated region
    $region14: #{tpu_custom_call.1} parent=1 // pred_check
      _
    $region15: #{tpu_custom_call.1} parent=1 // pred_check_branch
      %28 = sbr.rel (0) target = $region17
    $region16: #{tpu_custom_call.1} parent=1 // pred_region
      %30 = vsyncadd [#allocation6], 0
      %s31 = sshll.u32 %s3, 4
      %s32 = int_to_ptr.hbm [resolvable:$true] %s31
      %s33 = sshll.u32 [#allocation5], 4
      %s34 = int_to_ptr.vmem [resolvable:$true] %s33
      %39 = dma.hbm_to_vmem [thread:$0]  %s32, 4096, %s34, [#allocation6], 128, 128, 8
    $region17: #{tpu_custom_call.1} parent=1 // pred_fallthru
      _
    // Predicated region
    $region18: #{tpu_custom_call.1} parent=1 // pred_check
      _
    $region19: #{tpu_custom_call.1} parent=1 // pred_check_branch
      %41 = sbr.rel (0) target = $region21
    $region20: #{tpu_custom_call.1} parent=1 // pred_region
      %43 = dma.done [#allocation3], 128
    $region21: #{tpu_custom_call.1} parent=1 // pred_fallthru
      _
    // Predicated region
    $region22: #{tpu_custom_call.1} parent=1 // pred_check
      _
    $region23: #{tpu_custom_call.1} parent=1 // pred_check_branch
      %45 = sbr.rel (0) target = $region25
    $region24: #{tpu_custom_call.1} parent=1 // pred_region
      %47 = dma.done [#allocation6], 4096
    $region25: #{tpu_custom_call.1} parent=1 // pred_fallthru
      _
    %v48 = vld [vmem:[%s0] sm:$0xff]
    %v49 = vld [vmem:[%s1] sm:$0xff]
    %v50 = vld [vmem:[#allocation2] sm:$0x1]
    %v51 = vld [vmem:[#allocation2 + $0x1] sm:$0x1]
    %v52 = vld [vmem:[#allocation2 + $0x2] sm:$0x1]
    %v53 = vld [vmem:[#allocation2 + $0x3] sm:$0x1]
    %v54 = vld [vmem:[#allocation2 + $0x4] sm:$0x1]
    %v55 = vld [vmem:[#allocation2 + $0x5] sm:$0x1]
    %v56 = vld [vmem:[#allocation2 + $0x6] sm:$0x1]
    %v57 = vld [vmem:[#allocation2 + $0x7] sm:$0x1]
    %v58 = vld [vmem:[#allocation5] sm:$0xff]
    %v59 = vld [vmem:[#allocation5 + $0x8] sm:$0xff]
    %v60 = vperm.slane %v51, 0
    %vm61 = vcmask 130048
    %v63 = vsel %vm61, %v48, 0
    %65 = vmatpush.msra.mxu0 0.0
    %66 = vmatpush.msra.mxu0 0.0
    %67 = vmatpush.msra.mxu0 0.0
    %68 = vmatpush.msra.mxu0 0.0
    %69 = vmatpush.msra.mxu0 0.0
    %70 = vmatpush.msra.mxu0 0.0
    %71 = vmatpush.msra.mxu0 0.0
    %72 = vmatpush.msra.mxu0 0.0
    %73 = vmatpush.msra.mxu0 0.0
    %74 = vmatpush.msra.mxu0 0.0
    %75 = vmatpush.msra.mxu0 0.0
    %76 = vmatpush.msra.mxu0 0.0
    %77 = vmatpush.msra.mxu0 0.0
    %78 = vmatpush.msra.mxu0 0.0
    %79 = vmatpush.msra.mxu0 %v59
    %80 = vmatpush.msra.mxu0 %v58
    %81 = vmatmul.f32.gmra.mxu0 %v63
    %v82 = vpop.f32.mrf.mxu0
    %v83 = vadd.f32 %v60, %v82
    %84 = vdwg.mxu0
    %v85 = vsel %vm61, %v83, 0.0
    %86 = vadd.xlane.f32.xlu0 %v85
    %v87 = vpop.xlane.xlu0 %86
    %v88 = vrcp.pop 16.0
    %v89 = vmul.f32 16.0, %v88
    %v90 = vsub.f32 1.0, %v89
    %v91 = vmul.f32 %v88, %v90
    %v92 = vadd.f32 %v88, %v91
    %vm93 = vweird.f32 %v88
    %v94 = vsel %vm93, %v88, %v92
    %v95 = vmul.f32 %v87, %v94
    %v96 = vsub.f32 %v83, %v95
    %v97 = vmul.f32 %v96, %v96
    %v98 = vsel %vm61, %v97, 0.0
    %99 = vadd.xlane.f32.xlu0 %v98
    %v100 = vpop.xlane.xlu0 %99
    %v101 = vmul.f32 %v100, %v94
    %v102 = vadd.f32 %v101, 1e-05
    %v103 = vrsqrt.pop %v102
    %v104 = vmul.f32 %v103, %v102
    %v105 = vmul.f32 %v104, %v103
    %v106 = vmul.f32 0.5, %v105
    %v107 = vsub.f32 1.5, %v106
    %v108 = vmul.f32 %v103, %v107
    %vm109 = vweird.f32 %v102
    %vm110 = vweird.f32 %v103
    %vm111 = vmor %vm109, %vm110
    %v112 = vsel %vm111, %v103, %v108
    %v113 = vmul.f32 %v96, %v112
    %v114 = vperm.slane %v52, 0
    %v115 = vmul.f32 %v113, %v114
    %v116 = vperm.slane %v53, 0
    %v117 = vadd.f32 %v115, %v116
    %v118 = vtanh.pop %v117
    %120 = vset.pattern.permute.xlu0 0
    %121 = vperm.xlu0 %120, %v49
    %v122 = vpop.permute.xlu0 %121
    %v124 = vperm.slane %v50, 0
    %v125 = vmul.f32 %v122, %v124
    %v126 = vand.u32 2147483647, %v125
    %vm127 = vcmp.le.f32.partialorder %v126, 0.7853982
    %vm128 = vcmp.lt.s32.totalorder %v125, 0
    %v129 = vand.u32 %v125, 2139095040
    %v130 = vshrl.u32 %v129, 23
    %v131 = vsub.s32 %v130, 127
    %v132 = vand.u32 2147483647, %v125
    %v133 = vand.u32 %v132, 8388607
    %v134 = vor.u32 %v133, 8388608
    %v135 = vsub.s32 0, %v134
    %v136 = vadd.s32 %v131, 1
    %vm137 = vcmp.gt.s32.totalorder %v136, 0
    %v138 = vsel %vm137, %v136, 0
    %v139 = vshrl.u32 %v138, 5
    %v140 = vand.u32 %v138, 31
    %v141 = vsub.s32 32, %v140
    %v142 = vshrl.u32 683565275, %v141
    %v143 = vshll.u32 683565275, %v140
    %v144 = vshrl.u32 2475754826, %v141
    %v145 = vor.u32 %v143, %v144
    %v146 = vshll.u32 2475754826, %v140
    %v147 = vshrl.u32 2131351028, %v141
    %v148 = vor.u32 %v146, %v147
    %v149 = vshll.u32 2131351028, %v140
    %v150 = vshrl.u32 2102212464, %v141
    %v151 = vor.u32 %v149, %v150
    %v152 = vshll.u32 2102212464, %v140
    %v153 = vshrl.u32 920167782, %v141
    %v154 = vor.u32 %v152, %v153
    %v155 = vshll.u32 920167782, %v140
    %v156 = vshrl.u32 1326507024, %v141
    %v157 = vor.u32 %v155, %v156
    %vm158 = vcmp.lt.s32.totalorder %v139, 1
    %vm159 = vcmp.lt.s32.totalorder %v139, 2
    %vm160 = vcmp.lt.s32.totalorder %v139, 3
    %vm161 = vcmp.lt.s32.totalorder %v139, 4
    %v162 = vsel %vm158, %v142, %v145
    %v163 = vsel %vm161, %v151, 2102212464
    %v164 = vsel %vm160, %v148, %v163
    %v165 = vsel %vm159, %v162, %v164
    %v166 = vsel %vm158, %v145, %v148
    %v167 = vsel %vm161, %v154, 920167782
    %v168 = vsel %vm160, %v151, %v167
    %v169 = vsel %vm159, %v166, %v168
    %v170 = vsel %vm158, %v148, %v151
    %v171 = vsel %vm161, %v157, 1326507024
    %v172 = vsel %vm160, %v154, %v171
    %v173 = vsel %vm159, %v170, %v172
    %v174 = vshll.u32 %v134, 8
    %v175 = vand.u32 %v174, 65535
    %v176 = vshrl.u32 %v174, 16
    %v177 = vand.u32 %v173, 65535
    %v178 = vshrl.u32 %v173, 16
    %v179 = vmul.u32 %v175, %v177
    %v180 = vmul.u32 %v175, %v178
    %v181 = vmul.u32 %v176, %v177
    %v182 = vmul.u32 %v176, %v178
    %v183 = vshll.u32 %v180, 16
    %v184 = vshrl.u32 %v180, 16
    %v185 = vshll.u32 %v181, 16
    %v186 = vshrl.u32 %v181, 16
    %vm187 = vc.u32 %v179, %v183
    %v188 = vsel %vm187, 1, 0
    %v189 = vadd.s32 %v179, %v183
    %v190 = vadd.s32 %v182, %v188
    %vm191 = vc.u32 %v189, %v185
    %v192 = vsel %vm191, 1, 0
    %v193 = vadd.s32 %v189, %v185
    %v194 = vadd.s32 %v190, %v192
    %v195 = vadd.s32 %v194, %v184
    %v196 = vadd.s32 %v195, %v186
    %v197 = vand.u32 %v174, 65535
    %v198 = vshrl.u32 %v174, 16
    %v199 = vand.u32 %v169, 65535
    %v200 = vshrl.u32 %v169, 16
    %v201 = vmul.u32 %v197, %v199
    %v202 = vmul.u32 %v197, %v200
    %v203 = vmul.u32 %v198, %v199
    %v204 = vmul.u32 %v198, %v200
    %v205 = vshll.u32 %v202, 16
    %v206 = vshrl.u32 %v202, 16
    %v207 = vshll.u32 %v203, 16
    %v208 = vshrl.u32 %v203, 16
    %vm209 = vc.u32 %v201, %v205
    %v210 = vsel %vm209, 1, 0
    %v211 = vadd.s32 %v201, %v205
    %v212 = vadd.s32 %v204, %v210
    %vm213 = vc.u32 %v211, %v207
    %v214 = vsel %vm213, 1, 0
    %v215 = vadd.s32 %v211, %v207
    %v216 = vadd.s32 %v212, %v214
    %v217 = vadd.s32 %v216, %v206
    %v218 = vadd.s32 %v217, %v208
    %v219 = vmul.u32 %v174, %v165
    %v220 = vadd.s32 %v196, %v215
    %vm221 = vc.u32 %v196, %v215
    %v222 = vadd.s32 %v218, 1
    %v223 = vsel %vm221, %v222, %v218
    %v224 = vadd.s32 %v219, %v223
    %v225 = vadd.s32 %v224, 536870912
    %v226 = vshrl.u32 %v225, 30
    %v227 = vshll.u32 %v226, 30
    %v228 = vsub.s32 %v224, %v227
    %vm229 = vcmp.lt.s32.totalorder %v228, 0
    %v230 = vsub.s32 0, %v228
    %v231 = vsel %vm229, %v230, %v228
    %v232 = vclz %v231
    %v233 = vsub.s32 %v232, 2
    %vm234 = vcmp.gt.s32.totalorder 0, %v233
    %v235 = vsel %vm234, 0, %v233
    %v236 = vsub.s32 32, %v235
    %v237 = vshll.u32 %v228, %v235
    %v238 = vshrl.u32 %v220, %v236
    %v239 = vor.u32 %v237, %v238
    %v240 = vsub.s32 4294967266, %v235
    %v241 = vadd.s32 %v240, 127
    %v242 = vshll.u32 %v241, 23
    %v243 = vor.u32 4788187, %v242
    %v244 = vand.u32 2147483647, %v243
    %v246 = vcvt.s32.f32 %v239
    %v247 = vmul.f32 %v246, %v244
    %v248 = vxor.u32 %v247, 2147483648
    %v249 = vsel %vm128, %v248, %v247
    %v250 = vsub.s32 4, %v226
    %v251 = vsel %vm128, %v250, %v226
    %v252 = vsel %vm127, %v125, %v249
    %v253 = vsel %vm127, 0, %v251
    %v254 = vmul.f32 %v252, %v252
    %v255 = vmul.f32 %v254, -0.001358992
    %v256 = vadd.f32 %v255, 0.041655596
    %v257 = vmul.f32 %v254, %v256
    %v258 = vadd.f32 %v257, -0.4999988
    %v259 = vmul.f32 %v254, %v258
    %v260 = vadd.f32 1.0, %v259
    %v261 = vmul.f32 %v252, %v252
    %v262 = vmul.f32 %v261, -0.00019511016
    %v263 = vadd.f32 %v262, 0.008332121
    %v264 = vmul.f32 %v261, %v263
    %v265 = vadd.f32 %v264, -0.16666654
    %v266 = vmul.f32 %v261, %v265
    %v267 = vadd.f32 %v266, 1.0
    %v268 = vmul.f32 %v267, %v252
    %vm269 = vweird.f32 %v125
    %v270 = vadd.s32 %v253, 3
    %v271 = vand.u32 %v270, 3
    %vm272 = vcmp.lt.s32.totalorder %v271, 2
    %vm273 = vcmp.eq.s32.totalorder %v271, 0
    %v274 = vxor.u32 %v268, 2147483648
    %v275 = vsel %vm273, %v260, %v274
    %vm276 = vcmp.eq.s32.totalorder %v271, 2
    %v277 = vxor.u32 %v260, 2147483648
    %v278 = vsel %vm276, %v277, %v268
    %v279 = vsel %vm272, %v275, %v278
    %v280 = vsel %vm269, nan, %v279
    %v281 = vld [vmem:[#allocation5 + $0x10] sm:$0xff]
    %v282 = vld [vmem:[#allocation5 + $0x18] sm:$0xff]
    %v283 = vand.u32 2147483647, %v125
    %vm284 = vcmp.le.f32.partialorder %v283, 0.7853982
    %vm285 = vcmp.lt.s32.totalorder %v125, 0
    %v286 = vand.u32 %v125, 2139095040
    %v287 = vshrl.u32 %v286, 23
    %v288 = vsub.s32 %v287, 127
    %v289 = vand.u32 2147483647, %v125
    %v290 = vand.u32 %v289, 8388607
    %v291 = vor.u32 %v290, 8388608
    %v292 = vsub.s32 0, %v291
    %v293 = vadd.s32 %v288, 1
    %vm294 = vcmp.gt.s32.totalorder %v293, 0
    %v295 = vsel %vm294, %v293, 0
    %v296 = vshrl.u32 %v295, 5
    %v297 = vand.u32 %v295, 31
    %v298 = vsub.s32 32, %v297
    %v299 = vshrl.u32 683565275, %v298
    %v300 = vshll.u32 683565275, %v297
    %v301 = vshrl.u32 2475754826, %v298
    %v302 = vor.u32 %v300, %v301
    %v303 = vshll.u32 2475754826, %v297
    %v304 = vshrl.u32 2131351028, %v298
    %v305 = vor.u32 %v303, %v304
    %v306 = vshll.u32 2131351028, %v297
    %v307 = vshrl.u32 2102212464, %v298
    %v308 = vor.u32 %v306, %v307
    %v309 = vshll.u32 2102212464, %v297
    %v310 = vshrl.u32 920167782, %v298
    %v311 = vor.u32 %v309, %v310
    %v312 = vshll.u32 920167782, %v297
    %v313 = vshrl.u32 1326507024, %v298
    %v314 = vor.u32 %v312, %v313
    %vm315 = vcmp.lt.s32.totalorder %v296, 1
    %vm316 = vcmp.lt.s32.totalorder %v296, 2
    %vm317 = vcmp.lt.s32.totalorder %v296, 3
    %vm318 = vcmp.lt.s32.totalorder %v296, 4
    %v319 = vsel %vm315, %v299, %v302
    %v320 = vsel %vm318, %v308, 2102212464
    %v321 = vsel %vm317, %v305, %v320
    %v322 = vsel %vm316, %v319, %v321
    %v323 = vsel %vm315, %v302, %v305
    %v324 = vsel %vm318, %v311, 920167782
    %v325 = vsel %vm317, %v308, %v324
    %v326 = vsel %vm316, %v323, %v325
    %v327 = vsel %vm315, %v305, %v308
    %v328 = vsel %vm318, %v314, 1326507024
    %v329 = vsel %vm317, %v311, %v328
    %v330 = vsel %vm316, %v327, %v329
    %v331 = vshll.u32 %v291, 8
    %v332 = vand.u32 %v331, 65535
    %v333 = vshrl.u32 %v331, 16
    %v334 = vand.u32 %v330, 65535
    %v335 = vshrl.u32 %v330, 16
    %v336 = vmul.u32 %v332, %v334
    %v337 = vmul.u32 %v332, %v335
    %v338 = vmul.u32 %v333, %v334
    %v339 = vmul.u32 %v333, %v335
    %v340 = vshll.u32 %v337, 16
    %v341 = vshrl.u32 %v337, 16
    %v342 = vshll.u32 %v338, 16
    %v343 = vshrl.u32 %v338, 16
    %vm344 = vc.u32 %v336, %v340
    %v345 = vsel %vm344, 1, 0
    %v346 = vadd.s32 %v336, %v340
    %v347 = vadd.s32 %v339, %v345
    %vm348 = vc.u32 %v346, %v342
    %v349 = vsel %vm348, 1, 0
    %v350 = vadd.s32 %v346, %v342
    %v351 = vadd.s32 %v347, %v349
    %v352 = vadd.s32 %v351, %v341
    %v353 = vadd.s32 %v352, %v343
    %v354 = vand.u32 %v331, 65535
    %v355 = vshrl.u32 %v331, 16
    %v356 = vand.u32 %v326, 65535
    %v357 = vshrl.u32 %v326, 16
    %v358 = vmul.u32 %v354, %v356
    %v359 = vmul.u32 %v354, %v357
    %v360 = vmul.u32 %v355, %v356
    %v361 = vmul.u32 %v355, %v357
    %v362 = vshll.u32 %v359, 16
    %v363 = vshrl.u32 %v359, 16
    %v364 = vshll.u32 %v360, 16
    %v365 = vshrl.u32 %v360, 16
    %vm366 = vc.u32 %v358, %v362
    %v367 = vsel %vm366, 1, 0
    %v368 = vadd.s32 %v358, %v362
    %v369 = vadd.s32 %v361, %v367
    %vm370 = vc.u32 %v368, %v364
    %v371 = vsel %vm370, 1, 0
    %v372 = vadd.s32 %v368, %v364
    %v373 = vadd.s32 %v369, %v371
    %v374 = vadd.s32 %v373, %v363
    %v375 = vadd.s32 %v374, %v365
    %v376 = vmul.u32 %v331, %v322
    %v377 = vadd.s32 %v353, %v372
    %vm378 = vc.u32 %v353, %v372
    %v379 = vadd.s32 %v375, 1
    %v380 = vsel %vm378, %v379, %v375
    %v381 = vadd.s32 %v376, %v380
    %v382 = vadd.s32 %v381, 536870912
    %v383 = vshrl.u32 %v382, 30
    %v384 = vshll.u32 %v383, 30
    %v385 = vsub.s32 %v381, %v384
    %vm386 = vcmp.lt.s32.totalorder %v385, 0
    %v387 = vsub.s32 0, %v385
    %v388 = vsel %vm386, %v387, %v385
    %v389 = vclz %v388
    %v390 = vsub.s32 %v389, 2
    %vm391 = vcmp.gt.s32.totalorder 0, %v390
    %v392 = vsel %vm391, 0, %v390
    %v393 = vsub.s32 32, %v392
    %v394 = vshll.u32 %v385, %v392
    %v395 = vshrl.u32 %v377, %v393
    %v396 = vor.u32 %v394, %v395
    %v397 = vsub.s32 4294967266, %v392
    %v398 = vadd.s32 %v397, 127
    %v399 = vshll.u32 %v398, 23
    %v400 = vor.u32 4788187, %v399
    %v401 = vand.u32 2147483647, %v400
    %v403 = vcvt.s32.f32 %v396
    %v404 = vmul.f32 %v403, %v401
    %v405 = vxor.u32 %v404, 2147483648
    %v406 = vsel %vm285, %v405, %v404
    %v407 = vsub.s32 4, %v383
    %v408 = vsel %vm285, %v407, %v383
    %v409 = vsel %vm284, %v125, %v406
    %v410 = vsel %vm284, 0, %v408
    %v411 = vmul.f32 %v409, %v409
    %v412 = vmul.f32 %v411, -0.001358992
    %v413 = vadd.f32 %v412, 0.041655596
    %v414 = vmul.f32 %v411, %v413
    %v415 = vadd.f32 %v414, -0.4999988
    %v416 = vmul.f32 %v411, %v415
    %v417 = vadd.f32 1.0, %v416
    %v418 = vmul.f32 %v409, %v409
    %v419 = vmul.f32 %v418, -0.00019511016
    %v420 = vadd.f32 %v419, 0.008332121
    %v421 = vmul.f32 %v418, %v420
    %v422 = vadd.f32 %v421, -0.16666654
    %v423 = vmul.f32 %v418, %v422
    %v424 = vadd.f32 %v423, 1.0
    %v425 = vmul.f32 %v424, %v409
    %vm426 = vweird.f32 %v125
    %v427 = vand.u32 %v410, 3
    %vm428 = vcmp.lt.s32.totalorder %v427, 2
    %vm429 = vcmp.eq.s32.totalorder %v427, 0
    %v430 = vxor.u32 %v425, 2147483648
    %v431 = vsel %vm429, %v417, %v430
    %vm432 = vcmp.eq.s32.totalorder %v427, 2
    %v433 = vxor.u32 %v417, 2147483648
    %v434 = vsel %vm432, %v433, %v425
    %v435 = vsel %vm428, %v431, %v434
    %v436 = vsel %vm426, nan, %v435
    %v437 = vld [vmem:[#allocation5 + $0x20] sm:$0xff]
    %v438 = vld [vmem:[#allocation5 + $0x28] sm:$0xff]
    %v440 = vsel %vm61, %v436, 0
    %442 = vmatpush.msra.mxu0 0.0
    %443 = vmatpush.msra.mxu0 0.0
    %444 = vmatpush.msra.mxu0 0.0
    %445 = vmatpush.msra.mxu0 0.0
    %446 = vmatpush.msra.mxu0 0.0
    %447 = vmatpush.msra.mxu0 0.0
    %448 = vmatpush.msra.mxu0 0.0
    %449 = vmatpush.msra.mxu0 0.0
    %450 = vmatpush.msra.mxu0 0.0
    %451 = vmatpush.msra.mxu0 0.0
    %452 = vmatpush.msra.mxu0 0.0
    %453 = vmatpush.msra.mxu0 0.0
    %454 = vmatpush.msra.mxu0 0.0
    %455 = vmatpush.msra.mxu0 0.0
    %456 = vmatpush.msra.mxu0 %v438
    %457 = vmatpush.msra.mxu0 %v437
    %458 = vmatmul.f32.gmra.mxu0 %v440
    %v459 = vpop.f32.mrf.mxu0
    %v460 = vadd.f32 0.0, %v459
    %461 = vdwg.mxu0
    %v463 = vsel %vm61, %v280, 0
    %465 = vmatpush.msra.mxu0 0.0
    %466 = vmatpush.msra.mxu0 0.0
    %467 = vmatpush.msra.mxu0 0.0
    %468 = vmatpush.msra.mxu0 0.0
    %469 = vmatpush.msra.mxu0 0.0
    %470 = vmatpush.msra.mxu0 0.0
    %471 = vmatpush.msra.mxu0 0.0
    %472 = vmatpush.msra.mxu0 0.0
    %473 = vmatpush.msra.mxu0 0.0
    %474 = vmatpush.msra.mxu0 0.0
    %475 = vmatpush.msra.mxu0 0.0
    %476 = vmatpush.msra.mxu0 0.0
    %477 = vmatpush.msra.mxu0 0.0
    %478 = vmatpush.msra.mxu0 0.0
    %479 = vmatpush.msra.mxu0 %v282
    %480 = vmatpush.msra.mxu0 %v281
    %481 = vmatmul.f32.gmra.mxu0 %v463
    %v482 = vpop.f32.mrf.mxu0
    %v483 = vadd.f32 %v460, %v482
    %484 = vdwg.mxu0
    %v485 = vperm.slane %v54, 0
    %v486 = vadd.f32 %v483, %v485
    %v487 = vmax.f32 %v486, 0.0
    %v488 = vld [vmem:[#allocation5 + $0x30] sm:$0xff]
    %v489 = vld [vmem:[#allocation5 + $0x38] sm:$0xff]
    %v490 = vld [vmem:[#allocation5 + $0x40] sm:$0xff]
    %v491 = vld [vmem:[#allocation5 + $0x48] sm:$0xff]
    %v492 = vld [vmem:[#allocation5 + $0x50] sm:$0xff]
    %v493 = vld [vmem:[#allocation5 + $0x58] sm:$0xff]
    %v494 = vld [vmem:[#allocation5 + $0x60] sm:$0xff]
    %v495 = vld [vmem:[#allocation5 + $0x68] sm:$0xff]
    %v496 = vld [vmem:[#allocation5 + $0x70] sm:$0xff]
    %v497 = vld [vmem:[#allocation5 + $0x78] sm:$0xff]
    %vm498 = vcmask 523264
    %v500 = vsel %vm498, %v487, 0
    %502 = vmatpush.msra.mxu0 0.0
    %503 = vmatpush.msra.mxu0 0.0
    %504 = vmatpush.msra.mxu0 0.0
    %505 = vmatpush.msra.mxu0 0.0
    %506 = vmatpush.msra.mxu0 0.0
    %507 = vmatpush.msra.mxu0 0.0
    %508 = vmatpush.msra.mxu0 0.0
    %509 = vmatpush.msra.mxu0 0.0
    %510 = vmatpush.msra.mxu0 %v497
    %511 = vmatpush.msra.mxu0 %v496
    %512 = vmatpush.msra.mxu0 %v495
    %513 = vmatpush.msra.mxu0 %v494
    %514 = vmatpush.msra.mxu0 %v493
    %515 = vmatpush.msra.mxu0 %v492
    %516 = vmatpush.msra.mxu0 %v491
    %517 = vmatpush.msra.mxu0 %v490
    %518 = vmatmul.f32.gmra.mxu0 %v500
    %v519 = vpop.f32.mrf.mxu0
    %v520 = vadd.f32 0.0, %v519
    %521 = vdwg.mxu0
    %v523 = vsel %vm61, %v118, 0
    %525 = vmatpush.msra.mxu0 0.0
    %526 = vmatpush.msra.mxu0 0.0
    %527 = vmatpush.msra.mxu0 0.0
    %528 = vmatpush.msra.mxu0 0.0
    %529 = vmatpush.msra.mxu0 0.0
    %530 = vmatpush.msra.mxu0 0.0
    %531 = vmatpush.msra.mxu0 0.0
    %532 = vmatpush.msra.mxu0 0.0
    %533 = vmatpush.msra.mxu0 0.0
    %534 = vmatpush.msra.mxu0 0.0
    %535 = vmatpush.msra.mxu0 0.0
    %536 = vmatpush.msra.mxu0 0.0
    %537 = vmatpush.msra.mxu0 0.0
    %538 = vmatpush.msra.mxu0 0.0
    %539 = vmatpush.msra.mxu0 %v489
    %540 = vmatpush.msra.mxu0 %v488
    %541 = vmatmul.f32.gmra.mxu0 %v523
    %v542 = vpop.f32.mrf.mxu0
    %v543 = vadd.f32 %v520, %v542
    %544 = vdwg.mxu0
    %v545 = vperm.slane %v55, 0
    %v546 = vadd.f32 %v543, %v545
    %v547 = vmax.f32 %v546, 0.0
    %v548 = vld [vmem:[#allocation5 + $0x80] sm:$0xff]
    %v549 = vld [vmem:[#allocation5 + $0x88] sm:$0xff]
    %v550 = vld [vmem:[#allocation5 + $0x90] sm:$0xff]
    %v551 = vld [vmem:[#allocation5 + $0x98] sm:$0xff]
    %v552 = vld [vmem:[#allocation5 + $0xa0] sm:$0xff]
    %v553 = vld [vmem:[#allocation5 + $0xa8] sm:$0xff]
    %v554 = vld [vmem:[#allocation5 + $0xb0] sm:$0xff]
    %v555 = vld [vmem:[#allocation5 + $0xb8] sm:$0xff]
    %v556 = vperm.slane %v56, 0
    %v558 = vsel %vm498, %v547, 0
    %560 = vmatpush.msra.mxu0 0.0
    %561 = vmatpush.msra.mxu0 0.0
    %562 = vmatpush.msra.mxu0 0.0
    %563 = vmatpush.msra.mxu0 0.0
    %564 = vmatpush.msra.mxu0 0.0
    %565 = vmatpush.msra.mxu0 0.0
    %566 = vmatpush.msra.mxu0 0.0
    %567 = vmatpush.msra.mxu0 0.0
    %568 = vmatpush.msra.mxu0 %v555
    %569 = vmatpush.msra.mxu0 %v554
    %570 = vmatpush.msra.mxu0 %v553
    %571 = vmatpush.msra.mxu0 %v552
    %572 = vmatpush.msra.mxu0 %v551
    %573 = vmatpush.msra.mxu0 %v550
    %574 = vmatpush.msra.mxu0 %v549
    %575 = vmatpush.msra.mxu0 %v548
    %576 = vmatmul.f32.gmra.mxu0 %v558
    %v577 = vpop.f32.mrf.mxu0
    %v578 = vadd.f32 %v556, %v577
    %579 = vdwg.mxu0
    %v580 = vmax.f32 %v578, 0.0
    %v581 = vld [vmem:[#allocation5 + $0xc0] sm:$0xff]
    %v582 = vld [vmem:[#allocation5 + $0xc8] sm:$0xff]
    %v583 = vld [vmem:[#allocation5 + $0xd0] sm:$0xff]
    %v584 = vld [vmem:[#allocation5 + $0xd8] sm:$0xff]
    %v585 = vld [vmem:[#allocation5 + $0xe0] sm:$0xff]
    %v586 = vld [vmem:[#allocation5 + $0xe8] sm:$0xff]
    %v587 = vld [vmem:[#allocation5 + $0xf0] sm:$0xff]
    %v588 = vld [vmem:[#allocation5 + $0xf8] sm:$0xff]
    %v589 = vperm.slane %v57, 0
    %v591 = vsel %vm498, %v580, 0
    %593 = vmatpush.msra.mxu0 0.0
    %594 = vmatpush.msra.mxu0 0.0
    %595 = vmatpush.msra.mxu0 0.0
    %596 = vmatpush.msra.mxu0 0.0
    %597 = vmatpush.msra.mxu0 0.0
    %598 = vmatpush.msra.mxu0 0.0
    %599 = vmatpush.msra.mxu0 0.0
    %600 = vmatpush.msra.mxu0 0.0
    %601 = vmatpush.msra.mxu0 %v588
    %602 = vmatpush.msra.mxu0 %v587
    %603 = vmatpush.msra.mxu0 %v586
    %604 = vmatpush.msra.mxu0 %v585
    %605 = vmatpush.msra.mxu0 %v584
    %606 = vmatpush.msra.mxu0 %v583
    %607 = vmatpush.msra.mxu0 %v582
    %608 = vmatpush.msra.mxu0 %v581
    %609 = vmatmul.f32.gmra.mxu0 %v591
    %v610 = vpop.f32.mrf.mxu0
    %v611 = vadd.f32 %v589, %v610
    %612 = vdwg.mxu0
    %613 = vst [vmem:[#allocation7] sm:$0xff] %v611
    // Predicated region
    $region26: #{tpu_custom_call.1} parent=1 // pred_check
      _
    $region27: #{tpu_custom_call.1} parent=1 // pred_check_branch
      %615 = sbr.rel (0) target = $region29
    $region28: #{tpu_custom_call.1} parent=1 // pred_region
      %617 = vsyncadd [#allocation4], 0
      %s619 = sshll.u32 [#allocation7], 4
      %s620 = int_to_ptr.vmem [resolvable:$true] %s619
      %s621 = sshll.u32 %s4, 4
      %s622 = int_to_ptr.hbm [resolvable:$true] %s621
      %624 = dma.vmem_to_hbm [thread:$0]  %s620, 128, %s622, [#allocation4]
    $region29: #{tpu_custom_call.1} parent=1 // pred_fallthru
      _
    // Predicated region
    $region30: #{tpu_custom_call.1} parent=1 // pred_check
      _
    $region31: #{tpu_custom_call.1} parent=1 // pred_check_branch
      %626 = sbr.rel (0) target = $region33
    $region32: #{tpu_custom_call.1} parent=1 // pred_region
      %628 = dma.done [#allocation4], 128
    $region33: #{tpu_custom_call.1} parent=1 // pred_fallthru
      _
    %629 = vsyncpa [#allocation3], 1
    %630 = vsyncpa [#allocation6], 1
    %631 = vsyncpa [#allocation4], 1

</llo_original>
